<compile_context>
chip_gen: v7x
topology: tpu7x:2x2x1
jax: 0.10.0
libtpu: 0.0.40
codegen_flags: <defaults>
</compile_context>

<pallas_src>
import jax
import jax.numpy as jnp
from jax.experimental import pallas as pl
from jax.experimental.pallas import tpu as pltpu


# ---------------------------------------------------------------------------
# Kernel: copy the (whole-array) VMEM block input -> output.
# ---------------------------------------------------------------------------
def _identity_kernel(x_ref, o_ref):
    o_ref[...] = x_ref[...]


# ---------------------------------------------------------------------------
# Wrapper: present the tensor to the TPU as a lane-dense 2-D slab when the
# element count allows (last dim = 128), otherwise fall back to a single
# full-array block (exempt from the (8,128) tiling rule).  One pallas_call,
# one grid step, everything VMEM-resident.
# ---------------------------------------------------------------------------
def hax_forward(x):
    orig_shape = x.shape
    n = x.size

    if n % 128 == 0:
        rows, cols = n // 128, 128          # lane-dense: unmasked stores
    else:
        rows, cols = 1, n                   # full-array block fallback
    x2 = x.reshape(rows, cols)

    out = pl.pallas_call(
        _identity_kernel,
        out_shape=jax.ShapeDtypeStruct((rows, cols), x2.dtype),
        grid=(1,),
        in_specs=[pl.BlockSpec((rows, cols), lambda i: (0, 0))],
        out_specs=pl.BlockSpec((rows, cols), lambda i: (0, 0)),
        compiler_params=pltpu.CompilerParams(
            dimension_semantics=("arbitrary",),
            # Block is a few KiB; set an explicit small VMEM budget so the
            # compiler does not over-reserve (fits v5e/v6e/v7x identically).
            vmem_limit_bytes=4 * 1024 * 1024,
        ),
    )(x2)

    return out.reshape(orig_shape)


# ---------------------------------------------------------------------------
if __name__ == "__main__":
    key = jax.random.PRNGKey(0)
    # Small shapes consistent with how _Hax is used inside the model:
    # it is shape-agnostic, so (batch=2, channels=4, 16, 16) exercises a
    # generic 4-D activation tensor.
    x = jax.random.normal(key, (2, 4, 16, 16), jnp.float32)

    y = jax.jit(hax_forward)(x)
    y = jax.block_until_ready(y)

    assert y.shape == x.shape, (y.shape, x.shape)
    assert y.dtype == x.dtype, (y.dtype, x.dtype)
    assert bool(jnp.array_equal(y, x)), "identity mismatch"

    print("KERNEL_OK")
</pallas_src>

<mosaic_0001>
module attributes {stable_mosaic.version = 11 : i64} {
  func.func @_identity_kernel(%arg0: i32, %arg1: memref<16x128xf32, #tpu.memory_space<vmem>>, %arg2: memref<16x128xf32, #tpu.memory_space<vmem>>) attributes {dimension_semantics = [#tpu.dimension_semantics<arbitrary>], iteration_bounds = array<i64: 1>, scalar_prefetch = 0 : i64, scratch_operands = 0 : i64, tpu.core_type = #tpu.core_type<tc>, window_params = [{pipeline_mode = #tpu.pipeline_mode<synchronous>, transform_indices = @transform_0, window_bounds = array<i64: 16, 128>}, {pipeline_mode = #tpu.pipeline_mode<synchronous>, transform_indices = @transform_1, window_bounds = array<i64: 16, 128>}]} {
    %c0 = arith.constant 0 : index
    %c0_0 = arith.constant 0 : index
    %0 = vector.load %arg1[%c0, %c0_0] : memref<16x128xf32, #tpu.memory_space<vmem>>, vector<16x128xf32>
    %c0_1 = arith.constant 0 : index
    %c0_2 = arith.constant 0 : index
    %1 = vector.load %arg2[%c0_1, %c0_2] : memref<16x128xf32, #tpu.memory_space<vmem>>, vector<16x128xf32>
    tpu.vector_store %arg2[%c0_1, %c0_2], %0 {strides = array<i32>} : memref<16x128xf32, #tpu.memory_space<vmem>>, vector<16x128xf32>,
    return
  }
  func.func @transform_0(%arg0: i32) -> (i32, i32) {
    %c0_i32 = arith.constant 0 : i32
    %c0_i32_0 = arith.constant 0 : i32
    %c0_i32_1 = arith.constant 0 : i32
    return %c0_i32, %c0_i32_0 : i32, i32
  }
  func.func @transform_1(%arg0: i32) -> (i32, i32) {
    %c0_i32 = arith.constant 0 : i32
    %c0_i32_0 = arith.constant 0 : i32
    %c0_i32_1 = arith.constant 0 : i32
    return %c0_i32, %c0_i32_0 : i32, i32
  }
}

</mosaic_0001>

<llo_original>
// kernel: hax_forward.1
$region0: #{hax_forward.1}
  #allocation0 [shape = 'u32[]', space=smem, size = 0x4, offset = 0x4, fixed_abs, tag = 'smem constant byte address 0x4 - core index']
  #allocation1 [shape = 'u32[144,128]{1,0:T(1,128)}', space=vmem, size = 0x12000, scoped, tag = 'internal scratch']
  %s0 = inlined_call_operand.vmem [shape: f32[16,128], index: 0, kind: input, shape index: {}]
  %s1 = inlined_call_operand.vmem [shape: f32[16,128], index: 1, kind: output, shape index: {}]
  %s2 = sld [smem:[#allocation0]]
  $region14: #{hax_forward.1} parent=0
    _
  %s4 = ssub.s32 1, %s2
  %s5 = scalar_select 0, %s4, %s2
  // Predicated region
  $region2: #{hax_forward.1} parent=0 // pred_check
    _
  $region3: #{hax_forward.1} parent=0 // pred_check_branch
    %7 = sbr.rel (0) target = $region5
  $region4: #{hax_forward.1} parent=0 // pred_region
    _
  $region5: #{hax_forward.1} parent=0 // pred_fallthru
    _
  %v8 = vld [vmem:[%s0] sm:$0xff]
  %v9 = vld [vmem:[%s0 + $0x8] sm:$0xff]
  %10 = vst [vmem:[%s1] sm:$0xff] %v8
  %11 = vst [vmem:[%s1 + $0x8] sm:$0xff] %v9
  // Predicated region
  $region6: #{hax_forward.1} parent=0 // pred_check
    _
  $region7: #{hax_forward.1} parent=0 // pred_check_branch
    %13 = sbr.rel (0) target = $region9
  $region8: #{hax_forward.1} parent=0 // pred_region
    _
  $region9: #{hax_forward.1} parent=0 // pred_fallthru
    _
  // Predicated region
  $region10: #{hax_forward.1} parent=0 // pred_check
    _
  $region11: #{hax_forward.1} parent=0 // pred_check_branch
    %15 = sbr.rel (0) target = $region13
  $region12: #{hax_forward.1} parent=0 // pred_region
    _
  $region13: #{hax_forward.1} parent=0 // pred_fallthru
    _

</llo_original>
